<compile_context>
chip_gen: v7x
topology: tpu7x:2x2x1
jax: 0.10.0
libtpu: 0.0.40
codegen_flags: <defaults>
</compile_context>

<pallas_src>
import functools

import jax
import jax.numpy as jnp
from jax.experimental import pallas as pl
from jax.experimental.pallas import tpu as pltpu


def _elu(x):
    # F.elu with alpha=1.0:  x if x > 0 else exp(x) - 1.
    # Clamp the exp argument so the unselected branch never produces inf.
    return jnp.where(x > 0, x, jnp.exp(jnp.minimum(x, 0.0)) - 1.0)


def mine_kernel(xT_ref, w1_ref, b1_ref, w2_ref, b2_ref, w3_ref, b3_ref, o_ref):
    """One batch tile. xT_ref is (input_size, TB): batch lives on the lane axis.

    fc1 (tiny K)  -> VPU FMAs.
    fc2 (Hp x Hp) -> MXU, bf16 operands, f32 accumulation.
    fc3 (N = 1)   -> VPU multiply + XLU sublane reduction -> lane-dense (1, TB).
    All bias / activation math stays in f32.
    """
    xT = xT_ref[...]                                       # (I, TB) f32
    input_size = xT_ref.shape[0]

    # --- fc1: h1T[h, b] = sum_k W1[h, k] * x[b, k] + b1[h] ------------------
    acc = w1_ref[:, 0:1] * xT[0:1, :]                      # (Hp, TB)
    for k in range(1, input_size):                         # static, tiny loop
        acc = acc + w1_ref[:, k:k + 1] * xT[k:k + 1, :]
    h1 = _elu(acc + b1_ref[...])                           # (Hp, TB) f32

    # --- fc2: MXU matmul (bf16 in, f32 accumulate) --------------------------
    w2 = w2_ref[...]                                       # (Hp, Hp) bf16/f32
    pre2 = jnp.dot(w2, h1.astype(w2.dtype),
                   preferred_element_type=jnp.float32) + b2_ref[...]
    h2 = _elu(pre2)                                        # (Hp, TB) f32

    # --- fc3: out[b] = sum_h W3[h] * h2T[h, b] + b3 (VPU mul + XLU reduce) --
    out = jnp.sum(h2 * w3_ref[...], axis=0, keepdims=True) + b3_ref[...]  # (1, TB)
    o_ref[...] = out.astype(o_ref.dtype)


def _round_up(n, m):
    return ((n + m - 1) // m) * m


@functools.partial(jax.jit, static_argnames=("tile_b", "use_bf16"))
def mine_forward(x, params, *, tile_b=1024, use_bf16=True):
    """x: (B, input_size) f32. params in PyTorch layout. Returns (B, 1) f32."""
    w1, b1, w2, b2, w3, b3 = params
    B, I = x.shape
    H = w1.shape[0]
    Hp = _round_up(H, 128)                                 # 100 -> 128 lane pad

    # Zero-pad hidden dim (exact: padded channels stay 0 through ELU) and put
    # biases / fc3 weights in (Hp, 1) column form so they broadcast along lanes.
    w1p = jnp.pad(w1, ((0, Hp - H), (0, 0)))               # (Hp, I)
    b1p = jnp.pad(b1, (0, Hp - H)).reshape(Hp, 1)          # (Hp, 1)
    w2p = jnp.pad(w2, ((0, Hp - H), (0, Hp - H)))          # (Hp, Hp)
    if use_bf16:
        w2p = w2p.astype(jnp.bfloat16)                     # MXU-fed operand only
    b2p = jnp.pad(b2, (0, Hp - H)).reshape(Hp, 1)          # (Hp, 1)
    w3p = jnp.pad(w3.reshape(H), (0, Hp - H)).reshape(Hp, 1)  # (Hp, 1)
    b3p = b3.reshape(1, 1)                                 # (1, 1)

    # Batch on the lane axis, padded to a 128-aligned tile (well under VMEM
    # limits on v5e/v6e/v7x even at tile_b=1024/2048).
    tb = min(tile_b, _round_up(B, 128))
    B_pad = _round_up(B, tb)
    xT = jnp.pad(x.T, ((0, 0), (0, B_pad - B)))            # (I, B_pad)

    const = lambda i: (0, 0)                               # resident weights
    out_row = pl.pallas_call(
        mine_kernel,
        out_shape=jax.ShapeDtypeStruct((1, B_pad), jnp.float32),
        grid_spec=pltpu.PrefetchScalarGridSpec(
            num_scalar_prefetch=0,
            grid=(B_pad // tb,),
            in_specs=[
                pl.BlockSpec((I, tb), lambda i: (0, i)),   # x tile (lane-dense)
                pl.BlockSpec(w1p.shape, const),
                pl.BlockSpec(b1p.shape, const),
                pl.BlockSpec(w2p.shape, const),
                pl.BlockSpec(b2p.shape, const),
                pl.BlockSpec(w3p.shape, const),
                pl.BlockSpec(b3p.shape, const),
            ],
            out_specs=pl.BlockSpec((1, tb), lambda i: (0, i)),  # lane-dense out
        ),
        compiler_params=pltpu.CompilerParams(
            dimension_semantics=("parallel",),             # megacore sharding
        ),
    )(xT, w1p, b1p, w2p, b2p, w3p, b3p)

    return out_row[0, :B].reshape(B, 1)


def init_params(key, input_size=2, hidden_size=100):
    """PyTorch nn.Linear layout: weight (out, in), bias (out,). std=0.02, bias 0."""
    k1, k2, k3 = jax.random.split(key, 3)
    w1 = 0.02 * jax.random.normal(k1, (hidden_size, input_size), jnp.float32)
    b1 = jnp.zeros((hidden_size,), jnp.float32)
    w2 = 0.02 * jax.random.normal(k2, (hidden_size, hidden_size), jnp.float32)
    b2 = jnp.zeros((hidden_size,), jnp.float32)
    w3 = 0.02 * jax.random.normal(k3, (1, hidden_size), jnp.float32)
    b3 = jnp.zeros((1,), jnp.float32)
    return (w1, b1, w2, b2, w3, b3)


def mine_reference(x, params, *, bf16_fc2=False):
    """Pure-JAX reference of the PyTorch forward (optionally bf16-fed fc2)."""
    w1, b1, w2, b2, w3, b3 = params
    hi = jax.lax.Precision.HIGHEST
    h1 = _elu(jnp.dot(x, w1.T, precision=hi) + b1)
    if bf16_fc2:
        pre2 = jnp.dot(h1.astype(jnp.bfloat16), w2.T.astype(jnp.bfloat16),
                       preferred_element_type=jnp.float32) + b2
    else:
        pre2 = jnp.dot(h1, w2.T, precision=hi) + b2
    h2 = _elu(pre2)
    return jnp.dot(h2, w3.T, precision=hi) + b3


if __name__ == "__main__":
    key = jax.random.PRNGKey(0)
    k_x, k_p = jax.random.split(key)

    B, input_size, hidden_size = 37, 2, 100                # module defaults
    x = jax.random.normal(k_x, (B, input_size), jnp.float32)
    params = init_params(k_p, input_size, hidden_size)

    out = jax.block_until_ready(mine_forward(x, params))
    assert out.shape == (B, 1), out.shape

    # Tight check vs a reference with matching (bf16-fed) fc2 precision.
    ref_matched = mine_reference(x, params, bf16_fc2=True)
    assert jnp.allclose(out, ref_matched, atol=1e-5, rtol=1e-3), (
        "matched-precision mismatch, max abs err = "
        f"{float(jnp.max(jnp.abs(out - ref_matched)))}")

    # Sanity check vs the full-f32 PyTorch-equivalent forward.
    ref_f32 = mine_reference(x, params, bf16_fc2=False)
    assert jnp.allclose(out, ref_f32, atol=2e-4, rtol=2e-2), (
        "f32 reference mismatch, max abs err = "
        f"{float(jnp.max(jnp.abs(out - ref_f32)))}")

    print("KERNEL_OK")
</pallas_src>

<mosaic_0001>
module attributes {stable_mosaic.version = 11 : i64} {
  func.func @mine_kernel(%arg0: i32, %arg1: memref<2x128xf32, #tpu.memory_space<vmem>>, %arg2: memref<128x2xf32, #tpu.memory_space<vmem>>, %arg3: memref<128x1xf32, #tpu.memory_space<vmem>>, %arg4: memref<128x128xbf16, #tpu.memory_space<vmem>>, %arg5: memref<128x1xf32, #tpu.memory_space<vmem>>, %arg6: memref<128x1xf32, #tpu.memory_space<vmem>>, %arg7: memref<1x1xf32, #tpu.memory_space<vmem>>, %arg8: memref<1x128xf32, #tpu.memory_space<vmem>>) attributes {dimension_semantics = [#tpu.dimension_semantics<parallel>], iteration_bounds = array<i64: 1>, scalar_prefetch = 0 : i64, scratch_operands = 0 : i64, tpu.core_type = #tpu.core_type<tc>, window_params = [{transform_indices = @transform_0, window_bounds = array<i64: 2, 128>}, {pipeline_mode = #tpu.pipeline_mode<synchronous>, transform_indices = @transform_1, window_bounds = array<i64: 128, 2>}, {pipeline_mode = #tpu.pipeline_mode<synchronous>, transform_indices = @transform_2, window_bounds = array<i64: 128, 1>}, {pipeline_mode = #tpu.pipeline_mode<synchronous>, transform_indices = @transform_3, window_bounds = array<i64: 128, 128>}, {pipeline_mode = #tpu.pipeline_mode<synchronous>, transform_indices = @transform_4, window_bounds = array<i64: 128, 1>}, {pipeline_mode = #tpu.pipeline_mode<synchronous>, transform_indices = @transform_5, window_bounds = array<i64: 128, 1>}, {pipeline_mode = #tpu.pipeline_mode<synchronous>, transform_indices = @transform_6, window_bounds = array<i64: 1, 1>}, {transform_indices = @transform_7, window_bounds = array<i64: 1, 128>}]} {
    %c0 = arith.constant 0 : index
    %c0_0 = arith.constant 0 : index
    %0 = vector.load %arg1[%c0, %c0_0] : memref<2x128xf32, #tpu.memory_space<vmem>>, vector<2x128xf32>
    %c0_1 = arith.constant 0 : index
    %c0_2 = arith.constant 0 : index
    %1 = vector.load %arg2[%c0_1, %c0_2] : memref<128x2xf32, #tpu.memory_space<vmem>>, vector<128x1xf32>
    %2 = vector.extract_strided_slice %0 {offsets = [0, 0], sizes = [1, 128], strides = [1, 1]} : vector<2x128xf32> to vector<1x128xf32>
    %3 = vector.broadcast %1 : vector<128x1xf32> to vector<128x128xf32>
    %4 = vector.broadcast %2 : vector<1x128xf32> to vector<128x128xf32>
    %5 = arith.mulf %3, %4 : vector<128x128xf32>
    %c0_3 = arith.constant 0 : index
    %c1 = arith.constant 1 : index
    %6 = vector.load %arg2[%c0_3, %c1] : memref<128x2xf32, #tpu.memory_space<vmem>>, vector<128x1xf32>
    %7 = vector.extract_strided_slice %0 {offsets = [1, 0], sizes = [1, 128], strides = [1, 1]} : vector<2x128xf32> to vector<1x128xf32>
    %8 = vector.broadcast %6 : vector<128x1xf32> to vector<128x128xf32>
    %9 = vector.broadcast %7 : vector<1x128xf32> to vector<128x128xf32>
    %10 = arith.mulf %8, %9 : vector<128x128xf32>
    %11 = arith.addf %5, %10 : vector<128x128xf32>
    %c0_4 = arith.constant 0 : index
    %c0_5 = arith.constant 0 : index
    %12 = vector.load %arg3[%c0_4, %c0_5] : memref<128x1xf32, #tpu.memory_space<vmem>>, vector<128x1xf32>
    %13 = vector.broadcast %12 : vector<128x1xf32> to vector<128x128xf32>
    %14 = arith.addf %11, %13 : vector<128x128xf32>
    %cst = arith.constant 0.000000e+00 : f32
    %15 = vector.broadcast %cst : f32 to vector<128x128xf32>
    %16 = arith.cmpf ogt, %14, %15 : vector<128x128xf32>
    %cst_6 = arith.constant 0.000000e+00 : f32
    %17 = vector.broadcast %cst_6 : f32 to vector<128x128xf32>
    %18 = arith.minimumf %14, %17 : vector<128x128xf32>
    %19 = math.exp %18 : vector<128x128xf32>
    %cst_7 = arith.constant 1.000000e+00 : f32
    %20 = vector.broadcast %cst_7 : f32 to vector<128x128xf32>
    %21 = arith.subf %19, %20 : vector<128x128xf32>
    %22 = arith.select %16, %14, %21 : vector<128x128xi1>, vector<128x128xf32>
    %c0_8 = arith.constant 0 : index
    %c0_9 = arith.constant 0 : index
    %23 = vector.load %arg4[%c0_8, %c0_9] : memref<128x128xbf16, #tpu.memory_space<vmem>>, vector<128x128xbf16>
    %24 = arith.truncf %22 : vector<128x128xf32> to vector<128x128xbf16>
    %cst_10 = arith.constant dense<0.000000e+00> : vector<128x128xf32>
    %25 = tpu.matmul %23, %24, %cst_10 {dimension_numbers = #tpu.dot_dimension_numbers<[1], [0], [0], [1], [0, 0, 1, 1], [], []>} : vector<128x128xbf16>, vector<128x128xbf16>, vector<128x128xf32> -> vector<128x128xf32>
    %c0_11 = arith.constant 0 : index
    %c0_12 = arith.constant 0 : index
    %26 = vector.load %arg5[%c0_11, %c0_12] : memref<128x1xf32, #tpu.memory_space<vmem>>, vector<128x1xf32>
    %27 = vector.broadcast %26 : vector<128x1xf32> to vector<128x128xf32>
    %28 = arith.addf %25, %27 : vector<128x128xf32>
    %cst_13 = arith.constant 0.000000e+00 : f32
    %29 = vector.broadcast %cst_13 : f32 to vector<128x128xf32>
    %30 = arith.cmpf ogt, %28, %29 : vector<128x128xf32>
    %cst_14 = arith.constant 0.000000e+00 : f32
    %31 = vector.broadcast %cst_14 : f32 to vector<128x128xf32>
    %32 = arith.minimumf %28, %31 : vector<128x128xf32>
    %33 = math.exp %32 : vector<128x128xf32>
    %cst_15 = arith.constant 1.000000e+00 : f32
    %34 = vector.broadcast %cst_15 : f32 to vector<128x128xf32>
    %35 = arith.subf %33, %34 : vector<128x128xf32>
    %36 = arith.select %30, %28, %35 : vector<128x128xi1>, vector<128x128xf32>
    %c0_16 = arith.constant 0 : index
    %c0_17 = arith.constant 0 : index
    %37 = vector.load %arg6[%c0_16, %c0_17] : memref<128x1xf32, #tpu.memory_space<vmem>>, vector<128x1xf32>
    %38 = vector.broadcast %37 : vector<128x1xf32> to vector<128x128xf32>
    %39 = arith.mulf %36, %38 : vector<128x128xf32>
    %cst_18 = arith.constant dense<0.000000e+00> : vector<128xf32>
    %40 = vector.multi_reduction <add>, %39, %cst_18 [0] : vector<128x128xf32> to vector<128xf32>
    %41 = vector.shape_cast %40 : vector<128xf32> to vector<1x128xf32>
    %c0_19 = arith.constant 0 : index
    %c0_20 = arith.constant 0 : index
    %42 = vector.load %arg7[%c0_19, %c0_20] : memref<1x1xf32, #tpu.memory_space<vmem>>, vector<1x1xf32>
    %43 = vector.broadcast %42 : vector<1x1xf32> to vector<1x128xf32>
    %44 = arith.addf %41, %43 : vector<1x128xf32>
    %c0_21 = arith.constant 0 : index
    %c0_22 = arith.constant 0 : index
    %45 = vector.load %arg8[%c0_21, %c0_22] : memref<1x128xf32, #tpu.memory_space<vmem>>, vector<1x128xf32>
    tpu.vector_store %arg8[%c0_21, %c0_22], %44 {strides = array<i32>} : memref<1x128xf32, #tpu.memory_space<vmem>>, vector<1x128xf32>,
    return
  }
  func.func @transform_0(%arg0: i32) -> (i32, i32) {
    %c0_i32 = arith.constant 0 : i32
    %c0_i32_0 = arith.constant 0 : i32
    return %c0_i32, %arg0 : i32, i32
  }
  func.func @transform_1(%arg0: i32) -> (i32, i32) {
    %c0_i32 = arith.constant 0 : i32
    %c0_i32_0 = arith.constant 0 : i32
    %c0_i32_1 = arith.constant 0 : i32
    return %c0_i32, %c0_i32_0 : i32, i32
  }
  func.func @transform_2(%arg0: i32) -> (i32, i32) {
    %c0_i32 = arith.constant 0 : i32
    %c0_i32_0 = arith.constant 0 : i32
    %c0_i32_1 = arith.constant 0 : i32
    return %c0_i32, %c0_i32_0 : i32, i32
  }
  func.func @transform_3(%arg0: i32) -> (i32, i32) {
    %c0_i32 = arith.constant 0 : i32
    %c0_i32_0 = arith.constant 0 : i32
    %c0_i32_1 = arith.constant 0 : i32
    return %c0_i32, %c0_i32_0 : i32, i32
  }
  func.func @transform_4(%arg0: i32) -> (i32, i32) {
    %c0_i32 = arith.constant 0 : i32
    %c0_i32_0 = arith.constant 0 : i32
    %c0_i32_1 = arith.constant 0 : i32
    return %c0_i32, %c0_i32_0 : i32, i32
  }
  func.func @transform_5(%arg0: i32) -> (i32, i32) {
    %c0_i32 = arith.constant 0 : i32
    %c0_i32_0 = arith.constant 0 : i32
    %c0_i32_1 = arith.constant 0 : i32
    return %c0_i32, %c0_i32_0 : i32, i32
  }
  func.func @transform_6(%arg0: i32) -> (i32, i32) {
    %c0_i32 = arith.constant 0 : i32
    %c0_i32_0 = arith.constant 0 : i32
    %c0_i32_1 = arith.constant 0 : i32
    return %c0_i32, %c0_i32_0 : i32, i32
  }
  func.func @transform_7(%arg0: i32) -> (i32, i32) {
    %c0_i32 = arith.constant 0 : i32
    %c0_i32_0 = arith.constant 0 : i32
    return %c0_i32, %arg0 : i32, i32
  }
}

</mosaic_0001>

<llo_original>
// kernel: mine_forward.1
$region0: #{mine_forward.1}
  #allocation0 [shape = 'u32[]', space=smem, size = 0x4, offset = 0x4, fixed_abs, tag = 'smem constant byte address 0x4 - core index']
  #allocation1 [shape = 'u32[144,128]{1,0:T(1,128)}', space=vmem, size = 0x12000, scoped, tag = 'internal scratch']
  #allocation2 [shape = 'f32[1,1]{1,0:T(1,128)S(1)}', space=vmem, size = 0x200, scoped, tag = 'scoped memory for mine_forward.1']
  %s0 = inlined_call_operand.vmem [shape: f32[2,128], index: 0, kind: input, shape index: {}]
  %s1 = inlined_call_operand.vmem [shape: f32[128,2], index: 1, kind: input, shape index: {}]
  %s2 = inlined_call_operand.vmem [shape: f32[128,1], index: 2, kind: input, shape index: {}]
  %s3 = inlined_call_operand.vmem [shape: bf16[128,128], index: 3, kind: input, shape index: {}]
  %s4 = inlined_call_operand.vmem [shape: f32[128,1], index: 4, kind: input, shape index: {}]
  %s5 = inlined_call_operand.vmem [shape: f32[128,1], index: 5, kind: input, shape index: {}]
  %s6 = inlined_call_operand.<no memory space> [shape: f32[1,1], index: 6, kind: input, shape index: {}]
  %s7 = inlined_call_operand.vmem [shape: f32[1,128], index: 7, kind: output, shape index: {}]
  %s8 = sld [smem:[#allocation0]]
  $region38: #{mine_forward.1} parent=0
    _
  %s10 = ssub.s32 1, %s8
  %s11 = scalar_select 0, %s10, %s8
  %v12 = vstv %s6
  %13 = vst [vmem:[#allocation2] sm:$0x1] %v12
  // Predicated region
  $region2: #{mine_forward.1} parent=0 // pred_check
    _
  $region3: #{mine_forward.1} parent=0 // pred_check_branch
    %15 = sbr.rel (0) target = $region5
  $region4: #{mine_forward.1} parent=0 // pred_region
    _
  $region5: #{mine_forward.1} parent=0 // pred_fallthru
    _
  // Predicated region
  $region6: #{mine_forward.1} parent=0 // pred_check
    _
  $region7: #{mine_forward.1} parent=0 // pred_check_branch
    %17 = sbr.rel (0) target = $region9
  $region8: #{mine_forward.1} parent=0 // pred_region
    _
  $region9: #{mine_forward.1} parent=0 // pred_fallthru
    _
  // Predicated region
  $region10: #{mine_forward.1} parent=0 // pred_check
    _
  $region11: #{mine_forward.1} parent=0 // pred_check_branch
    %19 = sbr.rel (0) target = $region13
  $region12: #{mine_forward.1} parent=0 // pred_region
    _
  $region13: #{mine_forward.1} parent=0 // pred_fallthru
    _
  // Predicated region
  $region14: #{mine_forward.1} parent=0 // pred_check
    _
  $region15: #{mine_forward.1} parent=0 // pred_check_branch
    %21 = sbr.rel (0) target = $region17
  $region16: #{mine_forward.1} parent=0 // pred_region
    _
  $region17: #{mine_forward.1} parent=0 // pred_fallthru
    _
  // Predicated region
  $region18: #{mine_forward.1} parent=0 // pred_check
    _
  $region19: #{mine_forward.1} parent=0 // pred_check_branch
    %23 = sbr.rel (0) target = $region21
  $region20: #{mine_forward.1} parent=0 // pred_region
    _
  $region21: #{mine_forward.1} parent=0 // pred_fallthru
    _
  // Predicated region
  $region22: #{mine_forward.1} parent=0 // pred_check
    _
  $region23: #{mine_forward.1} parent=0 // pred_check_branch
    %25 = sbr.rel (0) target = $region25
  $region24: #{mine_forward.1} parent=0 // pred_region
    _
  $region25: #{mine_forward.1} parent=0 // pred_fallthru
    _
  // Predicated region
  $region26: #{mine_forward.1} parent=0 // pred_check
    _
  $region27: #{mine_forward.1} parent=0 // pred_check_branch
    %27 = sbr.rel (0) target = $region29
  $region28: #{mine_forward.1} parent=0 // pred_region
    _
  $region29: #{mine_forward.1} parent=0 // pred_fallthru
    _
  %v29 = vld [vmem:[%s0] sm:$0x3]
  %v30 = vld [vmem:[%s1] sm:$0xff]
  %v31 = vld [vmem:[%s1 + $0x8] sm:$0xff]
  %v32 = vld [vmem:[%s1 + $0x10] sm:$0xff]
  %v33 = vld [vmem:[%s1 + $0x18] sm:$0xff]
  %v34 = vld [vmem:[%s1 + $0x20] sm:$0xff]
  %v35 = vld [vmem:[%s1 + $0x28] sm:$0xff]
  %v36 = vld [vmem:[%s1 + $0x30] sm:$0xff]
  %v37 = vld [vmem:[%s1 + $0x38] sm:$0xff]
  %v38 = vld [vmem:[%s1 + $0x40] sm:$0xff]
  %v39 = vld [vmem:[%s1 + $0x48] sm:$0xff]
  %v40 = vld [vmem:[%s1 + $0x50] sm:$0xff]
  %v41 = vld [vmem:[%s1 + $0x58] sm:$0xff]
  %v42 = vld [vmem:[%s1 + $0x60] sm:$0xff]
  %v43 = vld [vmem:[%s1 + $0x68] sm:$0xff]
  %v44 = vld [vmem:[%s1 + $0x70] sm:$0xff]
  %v45 = vld [vmem:[%s1 + $0x78] sm:$0xff]
  %47 = vset.pattern.permute.xlu0 0
  %48 = vperm.xlu0 %47, %v30
  %v49 = vpop.permute.xlu0 %48
  %52 = vset.pattern.permute.xlu0 0
  %53 = vperm.xlu0 %52, %v31
  %v54 = vpop.permute.xlu0 %53
  %57 = vset.pattern.permute.xlu0 0
  %58 = vperm.xlu0 %57, %v32
  %v59 = vpop.permute.xlu0 %58
  %62 = vset.pattern.permute.xlu0 0
  %63 = vperm.xlu0 %62, %v33
  %v64 = vpop.permute.xlu0 %63
  %67 = vset.pattern.permute.xlu0 0
  %68 = vperm.xlu0 %67, %v34
  %v69 = vpop.permute.xlu0 %68
  %72 = vset.pattern.permute.xlu0 0
  %73 = vperm.xlu0 %72, %v35
  %v74 = vpop.permute.xlu0 %73
  %77 = vset.pattern.permute.xlu0 0
  %78 = vperm.xlu0 %77, %v36
  %v79 = vpop.permute.xlu0 %78
  %82 = vset.pattern.permute.xlu0 0
  %83 = vperm.xlu0 %82, %v37
  %v84 = vpop.permute.xlu0 %83
  %87 = vset.pattern.permute.xlu0 0
  %88 = vperm.xlu0 %87, %v38
  %v89 = vpop.permute.xlu0 %88
  %92 = vset.pattern.permute.xlu0 0
  %93 = vperm.xlu0 %92, %v39
  %v94 = vpop.permute.xlu0 %93
  %97 = vset.pattern.permute.xlu0 0
  %98 = vperm.xlu0 %97, %v40
  %v99 = vpop.permute.xlu0 %98
  %102 = vset.pattern.permute.xlu0 0
  %103 = vperm.xlu0 %102, %v41
  %v104 = vpop.permute.xlu0 %103
  %107 = vset.pattern.permute.xlu0 0
  %108 = vperm.xlu0 %107, %v42
  %v109 = vpop.permute.xlu0 %108
  %112 = vset.pattern.permute.xlu0 0
  %113 = vperm.xlu0 %112, %v43
  %v114 = vpop.permute.xlu0 %113
  %117 = vset.pattern.permute.xlu0 0
  %118 = vperm.xlu0 %117, %v44
  %v119 = vpop.permute.xlu0 %118
  %122 = vset.pattern.permute.xlu0 0
  %123 = vperm.xlu0 %122, %v45
  %v124 = vpop.permute.xlu0 %123
  %v126 = vlaneseq
  %v127 = vshrl.u32 %v126, 7
  %v128 = vsub.s32 0, %v127
  %v129 = vrot.slane %v29, %v128
  %v130 = vmul.f32 %v49, %v129
  %v131 = vmul.f32 %v54, %v129
  %v132 = vmul.f32 %v59, %v129
  %v133 = vmul.f32 %v64, %v129
  %v134 = vmul.f32 %v69, %v129
  %v135 = vmul.f32 %v74, %v129
  %v136 = vmul.f32 %v79, %v129
  %v137 = vmul.f32 %v84, %v129
  %v138 = vmul.f32 %v89, %v129
  %v139 = vmul.f32 %v94, %v129
  %v140 = vmul.f32 %v99, %v129
  %v141 = vmul.f32 %v104, %v129
  %v142 = vmul.f32 %v109, %v129
  %v143 = vmul.f32 %v114, %v129
  %v144 = vmul.f32 %v119, %v129
  %v145 = vmul.f32 %v124, %v129
  %146 = vset.pattern.permute.xlu0 1
  %147 = vperm.xlu0 %146, %v30
  %v148 = vpop.permute.xlu0 %147
  %150 = vset.pattern.permute.xlu0 1
  %151 = vperm.xlu0 %150, %v31
  %v152 = vpop.permute.xlu0 %151
  %154 = vset.pattern.permute.xlu0 1
  %155 = vperm.xlu0 %154, %v32
  %v156 = vpop.permute.xlu0 %155
  %158 = vset.pattern.permute.xlu0 1
  %159 = vperm.xlu0 %158, %v33
  %v160 = vpop.permute.xlu0 %159
  %162 = vset.pattern.permute.xlu0 1
  %163 = vperm.xlu0 %162, %v34
  %v164 = vpop.permute.xlu0 %163
  %166 = vset.pattern.permute.xlu0 1
  %167 = vperm.xlu0 %166, %v35
  %v168 = vpop.permute.xlu0 %167
  %170 = vset.pattern.permute.xlu0 1
  %171 = vperm.xlu0 %170, %v36
  %v172 = vpop.permute.xlu0 %171
  %174 = vset.pattern.permute.xlu0 1
  %175 = vperm.xlu0 %174, %v37
  %v176 = vpop.permute.xlu0 %175
  %178 = vset.pattern.permute.xlu0 1
  %179 = vperm.xlu0 %178, %v38
  %v180 = vpop.permute.xlu0 %179
  %182 = vset.pattern.permute.xlu0 1
  %183 = vperm.xlu0 %182, %v39
  %v184 = vpop.permute.xlu0 %183
  %186 = vset.pattern.permute.xlu0 1
  %187 = vperm.xlu0 %186, %v40
  %v188 = vpop.permute.xlu0 %187
  %190 = vset.pattern.permute.xlu0 1
  %191 = vperm.xlu0 %190, %v41
  %v192 = vpop.permute.xlu0 %191
  %194 = vset.pattern.permute.xlu0 1
  %195 = vperm.xlu0 %194, %v42
  %v196 = vpop.permute.xlu0 %195
  %198 = vset.pattern.permute.xlu0 1
  %199 = vperm.xlu0 %198, %v43
  %v200 = vpop.permute.xlu0 %199
  %202 = vset.pattern.permute.xlu0 1
  %203 = vperm.xlu0 %202, %v44
  %v204 = vpop.permute.xlu0 %203
  %206 = vset.pattern.permute.xlu0 1
  %207 = vperm.xlu0 %206, %v45
  %v208 = vpop.permute.xlu0 %207
  %v210 = vlaneseq
  %v211 = vshrl.u32 %v210, 7
  %v212 = vsub.s32 1, %v211
  %v213 = vrot.slane %v29, %v212
  %v214 = vmul.f32 %v148, %v213
  %v215 = vmul.f32 %v152, %v213
  %v216 = vmul.f32 %v156, %v213
  %v217 = vmul.f32 %v160, %v213
  %v218 = vmul.f32 %v164, %v213
  %v219 = vmul.f32 %v168, %v213
  %v220 = vmul.f32 %v172, %v213
  %v221 = vmul.f32 %v176, %v213
  %v222 = vmul.f32 %v180, %v213
  %v223 = vmul.f32 %v184, %v213
  %v224 = vmul.f32 %v188, %v213
  %v225 = vmul.f32 %v192, %v213
  %v226 = vmul.f32 %v196, %v213
  %v227 = vmul.f32 %v200, %v213
  %v228 = vmul.f32 %v204, %v213
  %v229 = vmul.f32 %v208, %v213
  %v230 = vadd.f32 %v130, %v214
  %v231 = vadd.f32 %v131, %v215
  %v232 = vadd.f32 %v132, %v216
  %v233 = vadd.f32 %v133, %v217
  %v234 = vadd.f32 %v134, %v218
  %v235 = vadd.f32 %v135, %v219
  %v236 = vadd.f32 %v136, %v220
  %v237 = vadd.f32 %v137, %v221
  %v238 = vadd.f32 %v138, %v222
  %v239 = vadd.f32 %v139, %v223
  %v240 = vadd.f32 %v140, %v224
  %v241 = vadd.f32 %v141, %v225
  %v242 = vadd.f32 %v142, %v226
  %v243 = vadd.f32 %v143, %v227
  %v244 = vadd.f32 %v144, %v228
  %v245 = vadd.f32 %v145, %v229
  %v246 = vld [vmem:[%s2] sm:$0xff]
  %v247 = vld [vmem:[%s2 + $0x8] sm:$0xff]
  %v248 = vld [vmem:[%s2 + $0x10] sm:$0xff]
  %v249 = vld [vmem:[%s2 + $0x18] sm:$0xff]
  %v250 = vld [vmem:[%s2 + $0x20] sm:$0xff]
  %v251 = vld [vmem:[%s2 + $0x28] sm:$0xff]
  %v252 = vld [vmem:[%s2 + $0x30] sm:$0xff]
  %v253 = vld [vmem:[%s2 + $0x38] sm:$0xff]
  %v254 = vld [vmem:[%s2 + $0x40] sm:$0xff]
  %v255 = vld [vmem:[%s2 + $0x48] sm:$0xff]
  %v256 = vld [vmem:[%s2 + $0x50] sm:$0xff]
  %v257 = vld [vmem:[%s2 + $0x58] sm:$0xff]
  %v258 = vld [vmem:[%s2 + $0x60] sm:$0xff]
  %v259 = vld [vmem:[%s2 + $0x68] sm:$0xff]
  %v260 = vld [vmem:[%s2 + $0x70] sm:$0xff]
  %v261 = vld [vmem:[%s2 + $0x78] sm:$0xff]
  %263 = vset.pattern.permute.xlu0 0
  %264 = vperm.xlu0 %263, %v246
  %v265 = vpop.permute.xlu0 %264
  %268 = vset.pattern.permute.xlu0 0
  %269 = vperm.xlu0 %268, %v247
  %v270 = vpop.permute.xlu0 %269
  %273 = vset.pattern.permute.xlu0 0
  %274 = vperm.xlu0 %273, %v248
  %v275 = vpop.permute.xlu0 %274
  %278 = vset.pattern.permute.xlu0 0
  %279 = vperm.xlu0 %278, %v249
  %v280 = vpop.permute.xlu0 %279
  %283 = vset.pattern.permute.xlu0 0
  %284 = vperm.xlu0 %283, %v250
  %v285 = vpop.permute.xlu0 %284
  %288 = vset.pattern.permute.xlu0 0
  %289 = vperm.xlu0 %288, %v251
  %v290 = vpop.permute.xlu0 %289
  %293 = vset.pattern.permute.xlu0 0
  %294 = vperm.xlu0 %293, %v252
  %v295 = vpop.permute.xlu0 %294
  %298 = vset.pattern.permute.xlu0 0
  %299 = vperm.xlu0 %298, %v253
  %v300 = vpop.permute.xlu0 %299
  %303 = vset.pattern.permute.xlu0 0
  %304 = vperm.xlu0 %303, %v254
  %v305 = vpop.permute.xlu0 %304
  %308 = vset.pattern.permute.xlu0 0
  %309 = vperm.xlu0 %308, %v255
  %v310 = vpop.permute.xlu0 %309
  %313 = vset.pattern.permute.xlu0 0
  %314 = vperm.xlu0 %313, %v256
  %v315 = vpop.permute.xlu0 %314
  %318 = vset.pattern.permute.xlu0 0
  %319 = vperm.xlu0 %318, %v257
  %v320 = vpop.permute.xlu0 %319
  %323 = vset.pattern.permute.xlu0 0
  %324 = vperm.xlu0 %323, %v258
  %v325 = vpop.permute.xlu0 %324
  %328 = vset.pattern.permute.xlu0 0
  %329 = vperm.xlu0 %328, %v259
  %v330 = vpop.permute.xlu0 %329
  %333 = vset.pattern.permute.xlu0 0
  %334 = vperm.xlu0 %333, %v260
  %v335 = vpop.permute.xlu0 %334
  %338 = vset.pattern.permute.xlu0 0
  %339 = vperm.xlu0 %338, %v261
  %v340 = vpop.permute.xlu0 %339
  %v342 = vadd.f32 %v230, %v265
  %v343 = vadd.f32 %v231, %v270
  %v344 = vadd.f32 %v232, %v275
  %v345 = vadd.f32 %v233, %v280
  %v346 = vadd.f32 %v234, %v285
  %v347 = vadd.f32 %v235, %v290
  %v348 = vadd.f32 %v236, %v295
  %v349 = vadd.f32 %v237, %v300
  %v350 = vadd.f32 %v238, %v305
  %v351 = vadd.f32 %v239, %v310
  %v352 = vadd.f32 %v240, %v315
  %v353 = vadd.f32 %v241, %v320
  %v354 = vadd.f32 %v242, %v325
  %v355 = vadd.f32 %v243, %v330
  %v356 = vadd.f32 %v244, %v335
  %v357 = vadd.f32 %v245, %v340
  %vm358 = vcmp.gt.f32.partialorder %v342, 0.0
  %vm359 = vcmp.gt.f32.partialorder %v343, 0.0
  %vm360 = vcmp.gt.f32.partialorder %v344, 0.0
  %vm361 = vcmp.gt.f32.partialorder %v345, 0.0
  %vm362 = vcmp.gt.f32.partialorder %v346, 0.0
  %vm363 = vcmp.gt.f32.partialorder %v347, 0.0
  %vm364 = vcmp.gt.f32.partialorder %v348, 0.0
  %vm365 = vcmp.gt.f32.partialorder %v349, 0.0
  %vm366 = vcmp.gt.f32.partialorder %v350, 0.0
  %vm367 = vcmp.gt.f32.partialorder %v351, 0.0
  %vm368 = vcmp.gt.f32.partialorder %v352, 0.0
  %vm369 = vcmp.gt.f32.partialorder %v353, 0.0
  %vm370 = vcmp.gt.f32.partialorder %v354, 0.0
  %vm371 = vcmp.gt.f32.partialorder %v355, 0.0
  %vm372 = vcmp.gt.f32.partialorder %v356, 0.0
  %vm373 = vcmp.gt.f32.partialorder %v357, 0.0
  %v374 = vmin.f32 %v342, 0.0
  %v375 = vmin.f32 %v343, 0.0
  %v376 = vmin.f32 %v344, 0.0
  %v377 = vmin.f32 %v345, 0.0
  %v378 = vmin.f32 %v346, 0.0
  %v379 = vmin.f32 %v347, 0.0
  %v380 = vmin.f32 %v348, 0.0
  %v381 = vmin.f32 %v349, 0.0
  %v382 = vmin.f32 %v350, 0.0
  %v383 = vmin.f32 %v351, 0.0
  %v384 = vmin.f32 %v352, 0.0
  %v385 = vmin.f32 %v353, 0.0
  %v386 = vmin.f32 %v354, 0.0
  %v387 = vmin.f32 %v355, 0.0
  %v388 = vmin.f32 %v356, 0.0
  %v389 = vmin.f32 %v357, 0.0
  %v390 = vmul.f32 %v374, 1.442695
  %v391 = vpow.pop %v390
  %v392 = vmul.f32 %v375, 1.442695
  %v393 = vpow.pop %v392
  %v394 = vmul.f32 %v376, 1.442695
  %v395 = vpow.pop %v394
  %v396 = vmul.f32 %v377, 1.442695
  %v397 = vpow.pop %v396
  %v398 = vmul.f32 %v378, 1.442695
  %v399 = vpow.pop %v398
  %v400 = vmul.f32 %v379, 1.442695
  %v401 = vpow.pop %v400
  %v402 = vmul.f32 %v380, 1.442695
  %v403 = vpow.pop %v402
  %v404 = vmul.f32 %v381, 1.442695
  %v405 = vpow.pop %v404
  %v406 = vmul.f32 %v382, 1.442695
  %v407 = vpow.pop %v406
  %v408 = vmul.f32 %v383, 1.442695
  %v409 = vpow.pop %v408
  %v410 = vmul.f32 %v384, 1.442695
  %v411 = vpow.pop %v410
  %v412 = vmul.f32 %v385, 1.442695
  %v413 = vpow.pop %v412
  %v414 = vmul.f32 %v386, 1.442695
  %v415 = vpow.pop %v414
  %v416 = vmul.f32 %v387, 1.442695
  %v417 = vpow.pop %v416
  %v418 = vmul.f32 %v388, 1.442695
  %v419 = vpow.pop %v418
  %v420 = vmul.f32 %v389, 1.442695
  %v421 = vpow.pop %v420
  %v422 = vsub.f32 %v391, 1.0
  %v423 = vsub.f32 %v393, 1.0
  %v424 = vsub.f32 %v395, 1.0
  %v425 = vsub.f32 %v397, 1.0
  %v426 = vsub.f32 %v399, 1.0
  %v427 = vsub.f32 %v401, 1.0
  %v428 = vsub.f32 %v403, 1.0
  %v429 = vsub.f32 %v405, 1.0
  %v430 = vsub.f32 %v407, 1.0
  %v431 = vsub.f32 %v409, 1.0
  %v432 = vsub.f32 %v411, 1.0
  %v433 = vsub.f32 %v413, 1.0
  %v434 = vsub.f32 %v415, 1.0
  %v435 = vsub.f32 %v417, 1.0
  %v436 = vsub.f32 %v419, 1.0
  %v437 = vsub.f32 %v421, 1.0
  %v438 = vsel %vm358, %v342, %v422
  %v439 = vsel %vm359, %v343, %v423
  %v440 = vsel %vm360, %v344, %v424
  %v441 = vsel %vm361, %v345, %v425
  %v442 = vsel %vm362, %v346, %v426
  %v443 = vsel %vm363, %v347, %v427
  %v444 = vsel %vm364, %v348, %v428
  %v445 = vsel %vm365, %v349, %v429
  %v446 = vsel %vm366, %v350, %v430
  %v447 = vsel %vm367, %v351, %v431
  %v448 = vsel %vm368, %v352, %v432
  %v449 = vsel %vm369, %v353, %v433
  %v450 = vsel %vm370, %v354, %v434
  %v451 = vsel %vm371, %v355, %v435
  %v452 = vsel %vm372, %v356, %v436
  %v453 = vsel %vm373, %v357, %v437
  %v454 = vld [vmem:[%s3] sm:$0xf]
  %v455 = vld [vmem:[%s3 + $0x4] sm:$0xf]
  %v456 = vld [vmem:[%s3 + $0x8] sm:$0xf]
  %v457 = vld [vmem:[%s3 + $0xc] sm:$0xf]
  %v458 = vld [vmem:[%s3 + $0x10] sm:$0xf]
  %v459 = vld [vmem:[%s3 + $0x14] sm:$0xf]
  %v460 = vld [vmem:[%s3 + $0x18] sm:$0xf]
  %v461 = vld [vmem:[%s3 + $0x1c] sm:$0xf]
  %v462 = vld [vmem:[%s3 + $0x20] sm:$0xf]
  %v463 = vld [vmem:[%s3 + $0x24] sm:$0xf]
  %v464 = vld [vmem:[%s3 + $0x28] sm:$0xf]
  %v465 = vld [vmem:[%s3 + $0x2c] sm:$0xf]
  %v466 = vld [vmem:[%s3 + $0x30] sm:$0xf]
  %v467 = vld [vmem:[%s3 + $0x34] sm:$0xf]
  %v468 = vld [vmem:[%s3 + $0x38] sm:$0xf]
  %v469 = vld [vmem:[%s3 + $0x3c] sm:$0xf]
  %v470 = vpack.c.bf16 %v439, %v438
  %v471 = vpack.c.bf16 %v441, %v440
  %v472 = vpack.c.bf16 %v443, %v442
  %v473 = vpack.c.bf16 %v445, %v444
  %v474 = vpack.c.bf16 %v447, %v446
  %v475 = vpack.c.bf16 %v449, %v448
  %v476 = vpack.c.bf16 %v451, %v450
  %v477 = vpack.c.bf16 %v453, %v452
  %v478 = vld [vmem:[%s4] sm:$0xff]
  %v479 = vld [vmem:[%s4 + $0x8] sm:$0xff]
  %v480 = vld [vmem:[%s4 + $0x10] sm:$0xff]
  %v481 = vld [vmem:[%s4 + $0x18] sm:$0xff]
  %v482 = vld [vmem:[%s4 + $0x20] sm:$0xff]
  %v483 = vld [vmem:[%s4 + $0x28] sm:$0xff]
  %v484 = vld [vmem:[%s4 + $0x30] sm:$0xff]
  %v485 = vld [vmem:[%s4 + $0x38] sm:$0xff]
  %v486 = vld [vmem:[%s4 + $0x40] sm:$0xff]
  %v487 = vld [vmem:[%s4 + $0x48] sm:$0xff]
  %v488 = vld [vmem:[%s4 + $0x50] sm:$0xff]
  %v489 = vld [vmem:[%s4 + $0x58] sm:$0xff]
  %v490 = vld [vmem:[%s4 + $0x60] sm:$0xff]
  %v491 = vld [vmem:[%s4 + $0x68] sm:$0xff]
  %v492 = vld [vmem:[%s4 + $0x70] sm:$0xff]
  %v493 = vld [vmem:[%s4 + $0x78] sm:$0xff]
  %495 = vset.pattern.permute.xlu0 0
  %496 = vperm.xlu0 %495, %v478
  %v497 = vpop.permute.xlu0 %496
  %500 = vset.pattern.permute.xlu0 0
  %501 = vperm.xlu0 %500, %v479
  %v502 = vpop.permute.xlu0 %501
  %505 = vset.pattern.permute.xlu0 0
  %506 = vperm.xlu0 %505, %v480
  %v507 = vpop.permute.xlu0 %506
  %510 = vset.pattern.permute.xlu0 0
  %511 = vperm.xlu0 %510, %v481
  %v512 = vpop.permute.xlu0 %511
  %515 = vset.pattern.permute.xlu0 0
  %516 = vperm.xlu0 %515, %v482
  %v517 = vpop.permute.xlu0 %516
  %520 = vset.pattern.permute.xlu0 0
  %521 = vperm.xlu0 %520, %v483
  %v522 = vpop.permute.xlu0 %521
  %525 = vset.pattern.permute.xlu0 0
  %526 = vperm.xlu0 %525, %v484
  %v527 = vpop.permute.xlu0 %526
  %530 = vset.pattern.permute.xlu0 0
  %531 = vperm.xlu0 %530, %v485
  %v532 = vpop.permute.xlu0 %531
  %535 = vset.pattern.permute.xlu0 0
  %536 = vperm.xlu0 %535, %v486
  %v537 = vpop.permute.xlu0 %536
  %540 = vset.pattern.permute.xlu0 0
  %541 = vperm.xlu0 %540, %v487
  %v542 = vpop.permute.xlu0 %541
  %545 = vset.pattern.permute.xlu0 0
  %546 = vperm.xlu0 %545, %v488
  %v547 = vpop.permute.xlu0 %546
  %550 = vset.pattern.permute.xlu0 0
  %551 = vperm.xlu0 %550, %v489
  %v552 = vpop.permute.xlu0 %551
  %555 = vset.pattern.permute.xlu0 0
  %556 = vperm.xlu0 %555, %v490
  %v557 = vpop.permute.xlu0 %556
  %560 = vset.pattern.permute.xlu0 0
  %561 = vperm.xlu0 %560, %v491
  %v562 = vpop.permute.xlu0 %561
  %565 = vset.pattern.permute.xlu0 0
  %566 = vperm.xlu0 %565, %v492
  %v567 = vpop.permute.xlu0 %566
  %570 = vset.pattern.permute.xlu0 0
  %571 = vperm.xlu0 %570, %v493
  %v572 = vpop.permute.xlu0 %571
  %v590 = vunpack.c.l.b16 %v454
  %v591 = vunpack.c.l.b16 %v455
  %v592 = vunpack.c.l.b16 %v456
  %v593 = vunpack.c.l.b16 %v457
  %v594 = vunpack.c.l.b16 %v458
  %v595 = vunpack.c.l.b16 %v459
  %v596 = vunpack.c.l.b16 %v460
  %v597 = vunpack.c.l.b16 %v461
  %v598 = vunpack.c.l.b16 %v462
  %v599 = vunpack.c.l.b16 %v463
  %v600 = vunpack.c.l.b16 %v464
  %v601 = vunpack.c.l.b16 %v465
  %v602 = vunpack.c.l.b16 %v466
  %v603 = vunpack.c.l.b16 %v467
  %v604 = vunpack.c.l.b16 %v468
  %v605 = vunpack.c.l.b16 %v469
  %v606 = vpack.c.b16 %v591, %v590
  %v607 = vpack.c.b16 %v593, %v592
  %v608 = vpack.c.b16 %v595, %v594
  %v609 = vpack.c.b16 %v597, %v596
  %v610 = vpack.c.b16 %v599, %v598
  %v611 = vpack.c.b16 %v601, %v600
  %v612 = vpack.c.b16 %v603, %v602
  %v613 = vpack.c.b16 %v605, %v604
  %622 = vmatprep.subr.bf16.mxu0 0
  %623 = vmatpush1.bf16.msra.mxu0 %v470
  %624 = vmatprep.subr.bf16.mxu0 0
  %625 = vmatpush1.bf16.msra.mxu0 %v471
  %626 = vmatprep.subr.bf16.mxu0 0
  %627 = vmatpush1.bf16.msra.mxu0 %v472
  %628 = vmatprep.subr.bf16.mxu0 0
  %629 = vmatpush1.bf16.msra.mxu0 %v473
  %630 = vmatprep.subr.bf16.mxu0 0
  %631 = vmatpush1.bf16.msra.mxu0 %v474
  %632 = vmatprep.subr.bf16.mxu0 0
  %633 = vmatpush1.bf16.msra.mxu0 %v475
  %634 = vmatprep.subr.bf16.mxu0 0
  %635 = vmatpush1.bf16.msra.mxu0 %v476
  %636 = vmatprep.subr.bf16.mxu0 0
  %637 = vmatpush1.bf16.msra.mxu0 %v477
  %638 = vmatprep.subr.bf16.mxu0 0
  %639 = vmatpush1.bf16.msra.mxu0 0
  %640 = vmatprep.subr.bf16.mxu0 0
  %641 = vmatpush1.bf16.msra.mxu0 0
  %642 = vmatprep.subr.bf16.mxu0 0
  %643 = vmatpush1.bf16.msra.mxu0 0
  %644 = vmatprep.subr.bf16.mxu0 0
  %645 = vmatpush1.bf16.msra.mxu0 0
  %646 = vmatprep.subr.bf16.mxu0 0
  %647 = vmatpush1.bf16.msra.mxu0 0
  %648 = vmatprep.subr.bf16.mxu0 0
  %649 = vmatpush1.bf16.msra.mxu0 0
  %650 = vmatprep.subr.bf16.mxu0 0
  %651 = vmatpush1.bf16.msra.mxu0 0
  %652 = vmatprep.subr.bf16.mxu0 0
  %653 = vmatpush1.bf16.msra.mxu0 0
  %654 = vmatprep.mubr.bf16.mxu0 0
  %655 = vmatmul.mubr.bf16.gmra.mrb[0].mxu0 %v606
  %v656 = vpop.f32.mrb[0].mxu0
  %v657 = vadd.f32 %v497, %v656
  %v658 = vpop.f32.mrb[0].mxu0
  %v659 = vpop.f32.mrb[0].mxu0
  %v660 = vadd.f32 %v502, %v659
  %v661 = vpop.f32.mrb[0].mxu0
  %662 = vmatprep.mubr.bf16.mxu0 0
  %663 = vmatmul.mubr.bf16.gmra.mrb[0].mxu0 %v607
  %v664 = vpop.f32.mrb[0].mxu0
  %v665 = vadd.f32 %v507, %v664
  %v666 = vpop.f32.mrb[0].mxu0
  %v667 = vpop.f32.mrb[0].mxu0
  %v668 = vadd.f32 %v512, %v667
  %v669 = vpop.f32.mrb[0].mxu0
  %670 = vmatprep.mubr.bf16.mxu0 0
  %671 = vmatmul.mubr.bf16.gmra.mrb[0].mxu0 %v608
  %v672 = vpop.f32.mrb[0].mxu0
  %v673 = vadd.f32 %v517, %v672
  %v674 = vpop.f32.mrb[0].mxu0
  %v675 = vpop.f32.mrb[0].mxu0
  %v676 = vadd.f32 %v522, %v675
  %v677 = vpop.f32.mrb[0].mxu0
  %678 = vmatprep.mubr.bf16.mxu0 0
  %679 = vmatmul.mubr.bf16.gmra.mrb[0].mxu0 %v609
  %v680 = vpop.f32.mrb[0].mxu0
  %v681 = vadd.f32 %v527, %v680
  %v682 = vpop.f32.mrb[0].mxu0
  %v683 = vpop.f32.mrb[0].mxu0
  %v684 = vadd.f32 %v532, %v683
  %v685 = vpop.f32.mrb[0].mxu0
  %686 = vmatprep.mubr.bf16.mxu0 0
  %687 = vmatmul.mubr.bf16.gmra.mrb[0].mxu0 %v610
  %v688 = vpop.f32.mrb[0].mxu0
  %v689 = vadd.f32 %v537, %v688
  %v690 = vpop.f32.mrb[0].mxu0
  %v691 = vpop.f32.mrb[0].mxu0
  %v692 = vadd.f32 %v542, %v691
  %v693 = vpop.f32.mrb[0].mxu0
  %694 = vmatprep.mubr.bf16.mxu0 0
  %695 = vmatmul.mubr.bf16.gmra.mrb[0].mxu0 %v611
  %v696 = vpop.f32.mrb[0].mxu0
  %v697 = vadd.f32 %v547, %v696
  %v698 = vpop.f32.mrb[0].mxu0
  %v699 = vpop.f32.mrb[0].mxu0
  %v700 = vadd.f32 %v552, %v699
  %v701 = vpop.f32.mrb[0].mxu0
  %702 = vmatprep.mubr.bf16.mxu0 0
  %703 = vmatmul.mubr.bf16.gmra.mrb[0].mxu0 %v612
  %v704 = vpop.f32.mrb[0].mxu0
  %v705 = vadd.f32 %v557, %v704
  %v706 = vpop.f32.mrb[0].mxu0
  %v707 = vpop.f32.mrb[0].mxu0
  %v708 = vadd.f32 %v562, %v707
  %v709 = vpop.f32.mrb[0].mxu0
  %710 = vmatprep.mubr.bf16.mxu0 0
  %711 = vmatmul.mubr.bf16.gmra.mrb[0].mxu0 %v613
  %v712 = vpop.f32.mrb[0].mxu0
  %v713 = vadd.f32 %v567, %v712
  %v714 = vpop.f32.mrb[0].mxu0
  %v715 = vpop.f32.mrb[0].mxu0
  %v716 = vadd.f32 %v572, %v715
  %v717 = vpop.f32.mrb[0].mxu0
  %718 = vdwg.mxu0
  %vm719 = vcmp.gt.f32.partialorder %v657, 0.0
  %vm720 = vcmp.gt.f32.partialorder %v660, 0.0
  %vm721 = vcmp.gt.f32.partialorder %v665, 0.0
  %vm722 = vcmp.gt.f32.partialorder %v668, 0.0
  %vm723 = vcmp.gt.f32.partialorder %v673, 0.0
  %vm724 = vcmp.gt.f32.partialorder %v676, 0.0
  %vm725 = vcmp.gt.f32.partialorder %v681, 0.0
  %vm726 = vcmp.gt.f32.partialorder %v684, 0.0
  %vm727 = vcmp.gt.f32.partialorder %v689, 0.0
  %vm728 = vcmp.gt.f32.partialorder %v692, 0.0
  %vm729 = vcmp.gt.f32.partialorder %v697, 0.0
  %vm730 = vcmp.gt.f32.partialorder %v700, 0.0
  %vm731 = vcmp.gt.f32.partialorder %v705, 0.0
  %vm732 = vcmp.gt.f32.partialorder %v708, 0.0
  %vm733 = vcmp.gt.f32.partialorder %v713, 0.0
  %vm734 = vcmp.gt.f32.partialorder %v716, 0.0
  %v735 = vmin.f32 %v657, 0.0
  %v736 = vmin.f32 %v660, 0.0
  %v737 = vmin.f32 %v665, 0.0
  %v738 = vmin.f32 %v668, 0.0
  %v739 = vmin.f32 %v673, 0.0
  %v740 = vmin.f32 %v676, 0.0
  %v741 = vmin.f32 %v681, 0.0
  %v742 = vmin.f32 %v684, 0.0
  %v743 = vmin.f32 %v689, 0.0
  %v744 = vmin.f32 %v692, 0.0
  %v745 = vmin.f32 %v697, 0.0
  %v746 = vmin.f32 %v700, 0.0
  %v747 = vmin.f32 %v705, 0.0
  %v748 = vmin.f32 %v708, 0.0
  %v749 = vmin.f32 %v713, 0.0
  %v750 = vmin.f32 %v716, 0.0
  %v751 = vmul.f32 %v735, 1.442695
  %v752 = vpow.pop %v751
  %v753 = vmul.f32 %v736, 1.442695
  %v754 = vpow.pop %v753
  %v755 = vmul.f32 %v737, 1.442695
  %v756 = vpow.pop %v755
  %v757 = vmul.f32 %v738, 1.442695
  %v758 = vpow.pop %v757
  %v759 = vmul.f32 %v739, 1.442695
  %v760 = vpow.pop %v759
  %v761 = vmul.f32 %v740, 1.442695
  %v762 = vpow.pop %v761
  %v763 = vmul.f32 %v741, 1.442695
  %v764 = vpow.pop %v763
  %v765 = vmul.f32 %v742, 1.442695
  %v766 = vpow.pop %v765
  %v767 = vmul.f32 %v743, 1.442695
  %v768 = vpow.pop %v767
  %v769 = vmul.f32 %v744, 1.442695
  %v770 = vpow.pop %v769
  %v771 = vmul.f32 %v745, 1.442695
  %v772 = vpow.pop %v771
  %v773 = vmul.f32 %v746, 1.442695
  %v774 = vpow.pop %v773
  %v775 = vmul.f32 %v747, 1.442695
  %v776 = vpow.pop %v775
  %v777 = vmul.f32 %v748, 1.442695
  %v778 = vpow.pop %v777
  %v779 = vmul.f32 %v749, 1.442695
  %v780 = vpow.pop %v779
  %v781 = vmul.f32 %v750, 1.442695
  %v782 = vpow.pop %v781
  %v783 = vsub.f32 %v752, 1.0
  %v784 = vsub.f32 %v754, 1.0
  %v785 = vsub.f32 %v756, 1.0
  %v786 = vsub.f32 %v758, 1.0
  %v787 = vsub.f32 %v760, 1.0
  %v788 = vsub.f32 %v762, 1.0
  %v789 = vsub.f32 %v764, 1.0
  %v790 = vsub.f32 %v766, 1.0
  %v791 = vsub.f32 %v768, 1.0
  %v792 = vsub.f32 %v770, 1.0
  %v793 = vsub.f32 %v772, 1.0
  %v794 = vsub.f32 %v774, 1.0
  %v795 = vsub.f32 %v776, 1.0
  %v796 = vsub.f32 %v778, 1.0
  %v797 = vsub.f32 %v780, 1.0
  %v798 = vsub.f32 %v782, 1.0
  %v799 = vsel %vm719, %v657, %v783
  %v800 = vsel %vm720, %v660, %v784
  %v801 = vsel %vm721, %v665, %v785
  %v802 = vsel %vm722, %v668, %v786
  %v803 = vsel %vm723, %v673, %v787
  %v804 = vsel %vm724, %v676, %v788
  %v805 = vsel %vm725, %v681, %v789
  %v806 = vsel %vm726, %v684, %v790
  %v807 = vsel %vm727, %v689, %v791
  %v808 = vsel %vm728, %v692, %v792
  %v809 = vsel %vm729, %v697, %v793
  %v810 = vsel %vm730, %v700, %v794
  %v811 = vsel %vm731, %v705, %v795
  %v812 = vsel %vm732, %v708, %v796
  %v813 = vsel %vm733, %v713, %v797
  %v814 = vsel %vm734, %v716, %v798
  %v815 = vld [vmem:[%s5] sm:$0xff]
  %v816 = vld [vmem:[%s5 + $0x8] sm:$0xff]
  %v817 = vld [vmem:[%s5 + $0x10] sm:$0xff]
  %v818 = vld [vmem:[%s5 + $0x18] sm:$0xff]
  %v819 = vld [vmem:[%s5 + $0x20] sm:$0xff]
  %v820 = vld [vmem:[%s5 + $0x28] sm:$0xff]
  %v821 = vld [vmem:[%s5 + $0x30] sm:$0xff]
  %v822 = vld [vmem:[%s5 + $0x38] sm:$0xff]
  %v823 = vld [vmem:[%s5 + $0x40] sm:$0xff]
  %v824 = vld [vmem:[%s5 + $0x48] sm:$0xff]
  %v825 = vld [vmem:[%s5 + $0x50] sm:$0xff]
  %v826 = vld [vmem:[%s5 + $0x58] sm:$0xff]
  %v827 = vld [vmem:[%s5 + $0x60] sm:$0xff]
  %v828 = vld [vmem:[%s5 + $0x68] sm:$0xff]
  %v829 = vld [vmem:[%s5 + $0x70] sm:$0xff]
  %v830 = vld [vmem:[%s5 + $0x78] sm:$0xff]
  %832 = vset.pattern.permute.xlu0 0
  %833 = vperm.xlu0 %832, %v815
  %v834 = vpop.permute.xlu0 %833
  %837 = vset.pattern.permute.xlu0 0
  %838 = vperm.xlu0 %837, %v816
  %v839 = vpop.permute.xlu0 %838
  %842 = vset.pattern.permute.xlu0 0
  %843 = vperm.xlu0 %842, %v817
  %v844 = vpop.permute.xlu0 %843
  %847 = vset.pattern.permute.xlu0 0
  %848 = vperm.xlu0 %847, %v818
  %v849 = vpop.permute.xlu0 %848
  %852 = vset.pattern.permute.xlu0 0
  %853 = vperm.xlu0 %852, %v819
  %v854 = vpop.permute.xlu0 %853
  %857 = vset.pattern.permute.xlu0 0
  %858 = vperm.xlu0 %857, %v820
  %v859 = vpop.permute.xlu0 %858
  %862 = vset.pattern.permute.xlu0 0
  %863 = vperm.xlu0 %862, %v821
  %v864 = vpop.permute.xlu0 %863
  %867 = vset.pattern.permute.xlu0 0
  %868 = vperm.xlu0 %867, %v822
  %v869 = vpop.permute.xlu0 %868
  %872 = vset.pattern.permute.xlu0 0
  %873 = vperm.xlu0 %872, %v823
  %v874 = vpop.permute.xlu0 %873
  %877 = vset.pattern.permute.xlu0 0
  %878 = vperm.xlu0 %877, %v824
  %v879 = vpop.permute.xlu0 %878
  %882 = vset.pattern.permute.xlu0 0
  %883 = vperm.xlu0 %882, %v825
  %v884 = vpop.permute.xlu0 %883
  %887 = vset.pattern.permute.xlu0 0
  %888 = vperm.xlu0 %887, %v826
  %v889 = vpop.permute.xlu0 %888
  %892 = vset.pattern.permute.xlu0 0
  %893 = vperm.xlu0 %892, %v827
  %v894 = vpop.permute.xlu0 %893
  %897 = vset.pattern.permute.xlu0 0
  %898 = vperm.xlu0 %897, %v828
  %v899 = vpop.permute.xlu0 %898
  %902 = vset.pattern.permute.xlu0 0
  %903 = vperm.xlu0 %902, %v829
  %v904 = vpop.permute.xlu0 %903
  %907 = vset.pattern.permute.xlu0 0
  %908 = vperm.xlu0 %907, %v830
  %v909 = vpop.permute.xlu0 %908
  %v911 = vmul.f32 %v799, %v834
  %v912 = vmul.f32 %v800, %v839
  %v913 = vmul.f32 %v801, %v844
  %v914 = vmul.f32 %v802, %v849
  %v915 = vmul.f32 %v803, %v854
  %v916 = vmul.f32 %v804, %v859
  %v917 = vmul.f32 %v805, %v864
  %v918 = vmul.f32 %v806, %v869
  %v919 = vmul.f32 %v807, %v874
  %v920 = vmul.f32 %v808, %v879
  %v921 = vmul.f32 %v809, %v884
  %v922 = vmul.f32 %v810, %v889
  %v923 = vmul.f32 %v811, %v894
  %v924 = vmul.f32 %v812, %v899
  %v925 = vmul.f32 %v813, %v904
  %v926 = vmul.f32 %v814, %v909
  %v927 = vadd.f32 %v911, %v912
  %v928 = vadd.f32 %v927, %v913
  %v929 = vadd.f32 %v928, %v914
  %v930 = vadd.f32 %v929, %v915
  %v931 = vadd.f32 %v930, %v916
  %v932 = vadd.f32 %v931, %v917
  %v933 = vadd.f32 %v932, %v918
  %v934 = vadd.f32 %v933, %v919
  %v935 = vadd.f32 %v934, %v920
  %v936 = vadd.f32 %v935, %v921
  %v937 = vadd.f32 %v936, %v922
  %v938 = vadd.f32 %v937, %v923
  %v939 = vadd.f32 %v938, %v924
  %v940 = vadd.f32 %v939, %v925
  %v941 = vadd.f32 %v940, %v926
  %v942 = vrot.slane %v941, 4
  %v943 = vadd.f32 %v941, %v942
  %v944 = vrot.slane %v943, 2
  %v945 = vadd.f32 %v943, %v944
  %v946 = vrot.slane %v945, 1
  %v947 = vadd.f32 %v945, %v946
  %v948 = vld [vmem:[#allocation2] sm:$0x1]
  %950 = vset.pattern.permute.xlu0 0
  %951 = vperm.xlu0 %950, %v948
  %v952 = vpop.permute.xlu0 %951
  %v954 = vlaneseq
  %v955 = vshrl.u32 %v954, 7
  %v956 = vsub.s32 0, %v955
  %v957 = vrot.slane %v952, %v956
  %v958 = vadd.f32 %v947, %v957
  %959 = vst [vmem:[%s7] sm:$0x1] %v958
  // Predicated region
  $region30: #{mine_forward.1} parent=0 // pred_check
    _
  $region31: #{mine_forward.1} parent=0 // pred_check_branch
    %961 = sbr.rel (0) target = $region33
  $region32: #{mine_forward.1} parent=0 // pred_region
    _
  $region33: #{mine_forward.1} parent=0 // pred_fallthru
    _
  // Predicated region
  $region34: #{mine_forward.1} parent=0 // pred_check
    _
  $region35: #{mine_forward.1} parent=0 // pred_check_branch
    %963 = sbr.rel (0) target = $region37
  $region36: #{mine_forward.1} parent=0 // pred_region
    _
  $region37: #{mine_forward.1} parent=0 // pred_fallthru
    _

</llo_original>
